<compile_context>
chip_gen: v5e
topology: v5e:2x2
jax: 0.10.0
libtpu: 0.0.40
codegen_flags: <defaults>
</compile_context>

<pallas_src>
import numpy as np

import jax
import jax.numpy as jnp
from jax.experimental import pallas as pl
from jax.experimental.pallas import tpu as pltpu


_VMEM_LIMIT_BYTES = 32 * 1024 * 1024   # explicit scoped-VMEM limit (ok on v5e/v6e/v7x)
_VMEM_BUDGET_FRAC = 0.6                # leave headroom for double-buffering / spills


def _mlp_kernel(x_ref, w1_ref, b1_ref, w2_ref, b2_ref, w3_ref, b3_ref, o_ref):
    # x arrives as f32 straight from HBM; cast to the matmul dtype just before
    # the MXU.  All accumulation / bias / ReLU in f32 (fast VPU path on all
    # generations, incl. v5e which has no bf16 VPU).
    x = x_ref[...].astype(w1_ref.dtype)
    # Layer 1: (TB, D) @ (D, 128)
    h1 = jnp.dot(x, w1_ref[...], preferred_element_type=jnp.float32)
    h1 = jnp.maximum(h1 + b1_ref[...], 0.0)
    # Layer 2: (TB, 128) @ (128, 128)   (hidden-64 zero-padded to 128, lane-dense)
    h2 = jnp.dot(h1.astype(w2_ref.dtype), w2_ref[...],
                 preferred_element_type=jnp.float32)
    h2 = jnp.maximum(h2 + b2_ref[...], 0.0)
    # Output layer: (TB, 128) @ (128, O), no activation.
    out = jnp.dot(h2.astype(w3_ref.dtype), w3_ref[...],
                  preferred_element_type=jnp.float32)
    o_ref[...] = (out + b3_ref[...]).astype(o_ref.dtype)


def _round_up(n, m):
    return ((n + m - 1) // m) * m


def _cdiv(a, b):
    return (a + b - 1) // b


def _pad_to(a, shape):
    pads = [(0, t - s) for s, t in zip(a.shape, shape)]
    if any(p[1] for p in pads):
        return jnp.pad(a, pads)
    return a


def _pick_batch_tile(batch, in_dim, h1_dim, h2_pad, out_dim, out_itemsize,
                     block_batch):
    """Formula-driven batch tile.

    Fit double-buffered x/out tiles + (conservatively double-counted) resident
    weights under ~60% of the scoped VMEM limit; 16-row aligned (bf16 sublane
    packing); cap so the batch grid has >= 2 steps (v7x has 2 TensorCores).
    """
    budget = int(_VMEM_LIMIT_BYTES * _VMEM_BUDGET_FRAC)
    # Weights (bf16) + biases (f32); count 2 copies in case the pipeline keeps
    # double buffers even for constant-index blocks.
    fixed = 2 * 2 * (in_dim * h1_dim + h1_dim * h2_pad + h2_pad * out_dim)
    fixed += 2 * 4 * (h1_dim + h2_pad + out_dim)
    per_row = (2 * in_dim * 4               # x tile, f32, double-buffered
               + 2 * out_dim * out_itemsize # out tile, double-buffered
               + in_dim * 2                 # in-kernel bf16 copy of x
               + (h1_dim + h2_pad) * 4)     # f32 intermediates h1 / h2
    tb = max(16, (budget - fixed) // per_row)
    tb = min(tb, 2048)                      # diminishing returns past ~2K rows
    if block_batch is not None:
        tb = min(tb, int(block_batch))
    else:
        # Keep >= 2 parallel batch tiles when the batch allows it (v7x megacore).
        tb = min(tb, max(16, _round_up(_cdiv(batch, 2), 16)))
    if tb >= batch:
        return batch                        # single full-batch block (always legal)
    return max(16, (tb // 16) * 16)         # 16-row aligned interior tiles


def tabular_classifier_forward(x, params, *, block_batch=None,
                               matmul_dtype=jnp.bfloat16, out_dtype=None):
    """x: (batch, input_dim) f32. params: dict of w1,b1,w2,b2,w3,b3 (f32)."""
    w1, b1, w2, b2, w3, b3 = (
        params["w1"], params["b1"], params["w2"],
        params["b2"], params["w3"], params["b3"],
    )
    batch, in_dim = x.shape
    h1_dim, h2_dim = w1.shape[1], w2.shape[1]     # 128, 64
    out_dim = w3.shape[1]
    out_dtype = x.dtype if out_dtype is None else out_dtype

    # Pad the 64-wide hidden layer to 128 (lane-dense layer-2/3 matmuls); the
    # zero columns/rows contribute exact zeros.  Weights are tiny: one-time
    # bf16 cast here, resident in VMEM for every grid step.
    h2_pad = _round_up(h2_dim, 128)
    w1_c = w1.astype(matmul_dtype)
    w2_c = _pad_to(w2, (h1_dim, h2_pad)).astype(matmul_dtype)
    w3_c = _pad_to(w3, (h2_pad, out_dim)).astype(matmul_dtype)
    b1_f = b1.astype(jnp.float32)
    b2_f = _pad_to(b2, (1, h2_pad)).astype(jnp.float32)
    b3_f = b3.astype(jnp.float32)

    out_itemsize = np.dtype(out_dtype).itemsize
    tb = _pick_batch_tile(batch, in_dim, h1_dim, h2_pad, out_dim,
                          out_itemsize, block_batch)
    grid = (_cdiv(batch, tb),)

    def resident(shape):
        # Same block every grid step -> stays VMEM-resident across the grid.
        return pl.BlockSpec(shape, lambda i: (0, 0))

    flops = 2 * batch * (in_dim * h1_dim + h1_dim * h2_pad + h2_pad * out_dim)
    bytes_accessed = (
        batch * in_dim * np.dtype(x.dtype).itemsize
        + 2 * (in_dim * h1_dim + h1_dim * h2_pad + h2_pad * out_dim)
        + 4 * (h1_dim + h2_pad + out_dim)
        + batch * out_dim * out_itemsize)

    out = pl.pallas_call(
        _mlp_kernel,
        out_shape=jax.ShapeDtypeStruct((batch, out_dim), out_dtype),
        grid=grid,
        in_specs=[
            # x: pipelined f32 batch tiles straight from HBM.  Feature dim is
            # left unpadded (block last dim == full array dim is legal).
            pl.BlockSpec((tb, in_dim), lambda i: (i, 0)),
            resident(w1_c.shape), resident(b1_f.shape),
            resident(w2_c.shape), resident(b2_f.shape),
            resident(w3_c.shape), resident(b3_f.shape),
        ],
        # Output written at its true (batch, out_dim) shape: no padded slab and
        # no post-kernel slice copy; ragged last batch tile is masked by Pallas.
        out_specs=pl.BlockSpec((tb, out_dim), lambda i: (i, 0)),
        compiler_params=pltpu.CompilerParams(
            # Batch tiles are independent -> shard across TensorCores (v7x).
            dimension_semantics=("parallel",),
            vmem_limit_bytes=_VMEM_LIMIT_BYTES,
        ),
        cost_estimate=pl.CostEstimate(
            flops=flops, transcendentals=0, bytes_accessed=bytes_accessed),
    )(x, w1_c, b1_f, w2_c, b2_f, w3_c, b3_f)

    return out


def init_params(key, input_dim, output_dim):
    """Deterministic init mimicking nn.Linear default (uniform +- 1/sqrt(fan_in))."""
    ks = jax.random.split(key, 6)

    def linear(kw, kb, fan_in, fan_out):
        bound = 1.0 / jnp.sqrt(jnp.float32(fan_in))
        w = jax.random.uniform(kw, (fan_in, fan_out), jnp.float32, -bound, bound)
        b = jax.random.uniform(kb, (1, fan_out), jnp.float32, -bound, bound)
        return w, b

    w1, b1 = linear(ks[0], ks[1], input_dim, 128)
    w2, b2 = linear(ks[2], ks[3], 128, 64)
    w3, b3 = linear(ks[4], ks[5], 64, output_dim)
    return {"w1": w1, "b1": b1, "w2": w2, "b2": b2, "w3": w3, "b3": b3}


def _reference_forward(x, params, matmul_dtype=jnp.bfloat16):
    """Plain-JAX reference mirroring the kernel's dtype choices exactly."""
    cast = lambda a: a.astype(matmul_dtype)
    h1 = jnp.dot(cast(x), cast(params["w1"]),
                 preferred_element_type=jnp.float32) + params["b1"]
    h1 = jnp.maximum(h1, 0.0)
    h2 = jnp.dot(cast(h1), cast(params["w2"]),
                 preferred_element_type=jnp.float32) + params["b2"]
    h2 = jnp.maximum(h2, 0.0)
    return jnp.dot(cast(h2), cast(params["w3"]),
                   preferred_element_type=jnp.float32) + params["b3"]


if __name__ == "__main__":
    key = jax.random.PRNGKey(0)
    k_x, k_p = jax.random.split(key)

    # Deliberately awkward small shapes: unpadded feature/output dims and a
    # ragged multi-step batch grid (block_batch=16 -> tiles of 16 and 4 rows).
    batch, input_dim, output_dim = 20, 37, 10
    x = jax.random.normal(k_x, (batch, input_dim), jnp.float32)
    params = init_params(k_p, input_dim, output_dim)

    out = tabular_classifier_forward(x, params, block_batch=16)
    jax.block_until_ready(out)

    ref = _reference_forward(x, params)
    assert out.shape == (batch, output_dim)
    assert jnp.allclose(out, ref, atol=1e-2, rtol=1e-2), float(
        jnp.max(jnp.abs(out - ref)))

    print("KERNEL_OK")
</pallas_src>

<mosaic_0001>
module attributes {stable_mosaic.version = 11 : i64} {
  func.func @_mlp_kernel(%arg0: i32, %arg1: memref<16x37xf32, #tpu.memory_space<vmem>>, %arg2: memref<37x128xbf16, #tpu.memory_space<vmem>>, %arg3: memref<1x128xf32, #tpu.memory_space<vmem>>, %arg4: memref<128x128xbf16, #tpu.memory_space<vmem>>, %arg5: memref<1x128xf32, #tpu.memory_space<vmem>>, %arg6: memref<128x10xbf16, #tpu.memory_space<vmem>>, %arg7: memref<1x10xf32, #tpu.memory_space<vmem>>, %arg8: memref<16x10xf32, #tpu.memory_space<vmem>>) attributes {dimension_semantics = [#tpu.dimension_semantics<parallel>], iteration_bounds = array<i64: 2>, scalar_prefetch = 0 : i64, scratch_operands = 0 : i64, tpu.core_type = #tpu.core_type<tc>, window_params = [{transform_indices = @transform_0, window_bounds = array<i64: 16, 37>}, {pipeline_mode = #tpu.pipeline_mode<synchronous>, transform_indices = @transform_1, window_bounds = array<i64: 37, 128>}, {pipeline_mode = #tpu.pipeline_mode<synchronous>, transform_indices = @transform_2, window_bounds = array<i64: 1, 128>}, {pipeline_mode = #tpu.pipeline_mode<synchronous>, transform_indices = @transform_3, window_bounds = array<i64: 128, 128>}, {pipeline_mode = #tpu.pipeline_mode<synchronous>, transform_indices = @transform_4, window_bounds = array<i64: 1, 128>}, {pipeline_mode = #tpu.pipeline_mode<synchronous>, transform_indices = @transform_5, window_bounds = array<i64: 128, 10>}, {pipeline_mode = #tpu.pipeline_mode<synchronous>, transform_indices = @transform_6, window_bounds = array<i64: 1, 10>}, {transform_indices = @transform_7, window_bounds = array<i64: 16, 10>}]} {
    %c0 = arith.constant 0 : index
    %c0_0 = arith.constant 0 : index
    %0 = vector.load %arg1[%c0, %c0_0] : memref<16x37xf32, #tpu.memory_space<vmem>>, vector<16x37xf32>
    %1 = arith.truncf %0 : vector<16x37xf32> to vector<16x37xbf16>
    %c0_1 = arith.constant 0 : index
    %c0_2 = arith.constant 0 : index
    %2 = vector.load %arg2[%c0_1, %c0_2] : memref<37x128xbf16, #tpu.memory_space<vmem>>, vector<37x128xbf16>
    %cst = arith.constant dense<0.000000e+00> : vector<16x128xf32>
    %3 = tpu.matmul %1, %2, %cst {dimension_numbers = #tpu.dot_dimension_numbers<[1], [0], [0], [1], [0, 0, 1, 1], [], []>} : vector<16x37xbf16>, vector<37x128xbf16>, vector<16x128xf32> -> vector<16x128xf32>
    %c0_3 = arith.constant 0 : index
    %c0_4 = arith.constant 0 : index
    %4 = vector.load %arg3[%c0_3, %c0_4] : memref<1x128xf32, #tpu.memory_space<vmem>>, vector<1x128xf32>
    %5 = vector.broadcast %4 : vector<1x128xf32> to vector<16x128xf32>
    %6 = arith.addf %3, %5 : vector<16x128xf32>
    %cst_5 = arith.constant 0.000000e+00 : f32
    %7 = vector.broadcast %cst_5 : f32 to vector<16x128xf32>
    %8 = arith.maximumf %6, %7 : vector<16x128xf32>
    %9 = arith.truncf %8 : vector<16x128xf32> to vector<16x128xbf16>
    %c0_6 = arith.constant 0 : index
    %c0_7 = arith.constant 0 : index
    %10 = vector.load %arg4[%c0_6, %c0_7] : memref<128x128xbf16, #tpu.memory_space<vmem>>, vector<128x128xbf16>
    %cst_8 = arith.constant dense<0.000000e+00> : vector<16x128xf32>
    %11 = tpu.matmul %9, %10, %cst_8 {dimension_numbers = #tpu.dot_dimension_numbers<[1], [0], [0], [1], [0, 0, 1, 1], [], []>} : vector<16x128xbf16>, vector<128x128xbf16>, vector<16x128xf32> -> vector<16x128xf32>
    %c0_9 = arith.constant 0 : index
    %c0_10 = arith.constant 0 : index
    %12 = vector.load %arg5[%c0_9, %c0_10] : memref<1x128xf32, #tpu.memory_space<vmem>>, vector<1x128xf32>
    %13 = vector.broadcast %12 : vector<1x128xf32> to vector<16x128xf32>
    %14 = arith.addf %11, %13 : vector<16x128xf32>
    %cst_11 = arith.constant 0.000000e+00 : f32
    %15 = vector.broadcast %cst_11 : f32 to vector<16x128xf32>
    %16 = arith.maximumf %14, %15 : vector<16x128xf32>
    %17 = arith.truncf %16 : vector<16x128xf32> to vector<16x128xbf16>
    %c0_12 = arith.constant 0 : index
    %c0_13 = arith.constant 0 : index
    %18 = vector.load %arg6[%c0_12, %c0_13] : memref<128x10xbf16, #tpu.memory_space<vmem>>, vector<128x10xbf16>
    %cst_14 = arith.constant dense<0.000000e+00> : vector<16x10xf32>
    %19 = tpu.matmul %17, %18, %cst_14 {dimension_numbers = #tpu.dot_dimension_numbers<[1], [0], [0], [1], [0, 0, 1, 1], [], []>} : vector<16x128xbf16>, vector<128x10xbf16>, vector<16x10xf32> -> vector<16x10xf32>
    %c0_15 = arith.constant 0 : index
    %c0_16 = arith.constant 0 : index
    %20 = vector.load %arg7[%c0_15, %c0_16] : memref<1x10xf32, #tpu.memory_space<vmem>>, vector<1x10xf32>
    %21 = vector.broadcast %20 : vector<1x10xf32> to vector<16x10xf32>
    %22 = arith.addf %19, %21 : vector<16x10xf32>
    %c0_17 = arith.constant 0 : index
    %c0_18 = arith.constant 0 : index
    %23 = vector.load %arg8[%c0_17, %c0_18] : memref<16x10xf32, #tpu.memory_space<vmem>>, vector<16x10xf32>
    tpu.vector_store %arg8[%c0_17, %c0_18], %22 {strides = array<i32>} : memref<16x10xf32, #tpu.memory_space<vmem>>, vector<16x10xf32>,
    return
  }
  func.func @transform_0(%arg0: i32) -> (i32, i32) {
    %c0_i32 = arith.constant 0 : i32
    %c0_i32_0 = arith.constant 0 : i32
    return %arg0, %c0_i32 : i32, i32
  }
  func.func @transform_1(%arg0: i32) -> (i32, i32) {
    %c0_i32 = arith.constant 0 : i32
    %c0_i32_0 = arith.constant 0 : i32
    %c0_i32_1 = arith.constant 0 : i32
    return %c0_i32, %c0_i32_0 : i32, i32
  }
  func.func @transform_2(%arg0: i32) -> (i32, i32) {
    %c0_i32 = arith.constant 0 : i32
    %c0_i32_0 = arith.constant 0 : i32
    %c0_i32_1 = arith.constant 0 : i32
    return %c0_i32, %c0_i32_0 : i32, i32
  }
  func.func @transform_3(%arg0: i32) -> (i32, i32) {
    %c0_i32 = arith.constant 0 : i32
    %c0_i32_0 = arith.constant 0 : i32
    %c0_i32_1 = arith.constant 0 : i32
    return %c0_i32, %c0_i32_0 : i32, i32
  }
  func.func @transform_4(%arg0: i32) -> (i32, i32) {
    %c0_i32 = arith.constant 0 : i32
    %c0_i32_0 = arith.constant 0 : i32
    %c0_i32_1 = arith.constant 0 : i32
    return %c0_i32, %c0_i32_0 : i32, i32
  }
  func.func @transform_5(%arg0: i32) -> (i32, i32) {
    %c0_i32 = arith.constant 0 : i32
    %c0_i32_0 = arith.constant 0 : i32
    %c0_i32_1 = arith.constant 0 : i32
    return %c0_i32, %c0_i32_0 : i32, i32
  }
  func.func @transform_6(%arg0: i32) -> (i32, i32) {
    %c0_i32 = arith.constant 0 : i32
    %c0_i32_0 = arith.constant 0 : i32
    %c0_i32_1 = arith.constant 0 : i32
    return %c0_i32, %c0_i32_0 : i32, i32
  }
  func.func @transform_7(%arg0: i32) -> (i32, i32) {
    %c0_i32 = arith.constant 0 : i32
    %c0_i32_0 = arith.constant 0 : i32
    return %arg0, %c0_i32 : i32, i32
  }
}

</mosaic_0001>

<llo_original>
// kernel: tpu_custom_call.1
$region0: #{tpu_custom_call.1}
  #allocation0 [shape = 'u32[]', space=smem, size = 0x4, offset = 0x4, fixed_abs, tag = 'smem constant byte address 0x4 - core index']
  #allocation1 [shape = 'u32[72,128]{1,0:T(1,128)}', space=vmem, size = 0x9000, scoped, tag = 'internal scratch']
  %s0 = inlined_call_operand.hbm [shape: f32[20,37], index: 0, kind: input, shape index: {}]
  %s1 = inlined_call_operand.hbm [shape: bf16[37,128], index: 1, kind: input, shape index: {}]
  %s2 = inlined_call_operand.vmem [shape: f32[1,128], index: 2, kind: input, shape index: {}]
  %s3 = inlined_call_operand.vmem [shape: bf16[128,128], index: 3, kind: input, shape index: {}]
  %s4 = inlined_call_operand.vmem [shape: f32[1,128], index: 4, kind: input, shape index: {}]
  %s5 = inlined_call_operand.vmem [shape: bf16[128,10], index: 5, kind: input, shape index: {}]
  %s6 = inlined_call_operand.vmem [shape: f32[1,10], index: 6, kind: input, shape index: {}]
  %s7 = inlined_call_operand.vmem [shape: f32[20,10], index: 7, kind: output, shape index: {}]
  %s8 = sld [smem:[#allocation0]]
  $region117: #{tpu_custom_call.1} parent=0
    _
  %s10 = ssub.s32 1, %s8
  %s11 = scalar_select 0, %s10, %s8
  $region1: #{tpu_custom_call.1} parent=0
    #allocation2 [shape = 'u8[16384]{0}', space=vmem, size = 0x4000, scoped, tag = 'input window, operand 0']
    #allocation3 [shape = 's32[2]{0}', space=sflag, size = 0x8, scoped, tag = 'scoped memory for tpu_custom_call.1']
    #allocation4 [shape = 'u8[10240]{0}', space=vmem, size = 0x2800, scoped, tag = 'input window, operand 1, single buffered']
    #allocation5 [shape = 's32[1]{0}', space=sflag, size = 0x4, scoped, tag = 'scoped memory for tpu_custom_call.1']
    #allocation6 [shape = 'u8[16384]{0}', space=vmem, size = 0x4000, scoped, tag = 'output window, operand 0']
    %12 = vsyncpa [#allocation3], 0
    %s13 = scalar_lea.sflag [#allocation3], 1
    %14 = vsyncpa %s13, 0
    %15 = vsyncpa [#allocation5], 0
    loop: start=0, step=1, limit=4
    $region2: #{tpu_custom_call.1} parent=1 // loop_pre_header
      _
    $region3: #{tpu_custom_call.1} parent=1 // loop_header
      %s17 = sphi 0, %s21
      %p18 = scmp.ge.s32.totalorder %s17, 4
      %s27 = sphi 0, %s29
      %s30 = sphi 0, %s27
      %s31 = sphi 0, %s30
      %s47 = sphi 0, %s31
      %s51 = sphi 0, %s51
      %s53 = sphi 0, %s51
      %s54 = sphi 0, %s53
      %s68 = sphi 0, %s54
      %s72 = sphi 0, %s72
      %s74 = sphi 0, %s72
      %s75 = sphi 0, %s74
      %s89 = sphi 0, %s75
      %s93 = sphi 0, %s93
      %s95 = sphi 0, %s93
      %s96 = sphi 0, %s95
      %s110 = sphi 0, %s96
      %s114 = sphi 0, %s114
      %s116 = sphi 0, %s114
      %s117 = sphi 0, %s116
      %s131 = sphi 0, %s117
      %s135 = sphi 0, %s135
      %s137 = sphi 0, %s135
      %s138 = sphi 0, %s137
      %s152 = sphi 0, %s138
      %s156 = sphi 0, %s156
      %s158 = sphi 0, %s156
      %s159 = sphi 0, %s158
      %s173 = sphi 0, %s159
      %s179 = sphi 0, %s181
      %s182 = sphi 0, %s179
      %s183 = sphi 0, %s182
      %s199 = sphi 0, %s183
    $region4: #{tpu_custom_call.1} parent=1 // loop_header_branch
      %20 = sbr.rel (%p18) target = $region8
    $region5: #{tpu_custom_call.1} parent=1 // loop_body
      %s22 = ssub.s32 %s17, 1
      %s23 = ssub.s32 %s17, 2
      %s24 = sadd.s32 %s17, 1
      %s25 = ssub.s32 %s17, %s24
      %p26 = scmp.eq.s32.totalorder %s25, 0
      %s28 = sadd.s32 %s27, 1
      %s29 = scalar_select %p26, %s27, %s28
      %p32 = pneg %p26
      %p33 = scmp.eq.s32.totalorder %s17, 1
      %p34 = por %p32, %p33
      %p35 = scmp.ne.s32.totalorder %s27, %s30
      %p36 = scmp.eq.s32.totalorder %s17, 0
      %p37 = por %p35, %p36
      %p38 = scmp.ne.s32.totalorder %s27, %s30
      %p39 = scmp.eq.s32.totalorder %s22, 1
      %p40 = por %p38, %p39
      %p41 = scmp.ne.s32.totalorder %s30, %s31
      %p42 = scmp.eq.s32.totalorder %s22, 0
      %p43 = por %p41, %p42
      %p44 = scmp.ne.s32.totalorder %s30, %s31
      %p45 = scmp.eq.s32.totalorder %s23, 1
      %p46 = por %p44, %p45
      %p48 = scmp.ne.s32.totalorder %s31, %s47
      %p49 = scmp.eq.s32.totalorder %s23, 0
      %p50 = por %p48, %p49
      %s52 = sadd.s32 %s51, 1
      %p55 = scmp.eq.s32.totalorder %s17, 1
      %p56 = scmp.ne.s32.totalorder %s51, %s53
      %p57 = scmp.eq.s32.totalorder %s17, 0
      %p58 = por %p56, %p57
      %p59 = scmp.ne.s32.totalorder %s51, %s53
      %p60 = scmp.eq.s32.totalorder %s22, 1
      %p61 = por %p59, %p60
      %p62 = scmp.ne.s32.totalorder %s53, %s54
      %p63 = scmp.eq.s32.totalorder %s22, 0
      %p64 = por %p62, %p63
      %p65 = scmp.ne.s32.totalorder %s53, %s54
      %p66 = scmp.eq.s32.totalorder %s23, 1
      %p67 = por %p65, %p66
      %p69 = scmp.ne.s32.totalorder %s54, %s68
      %p70 = scmp.eq.s32.totalorder %s23, 0
      %p71 = por %p69, %p70
      %s73 = sadd.s32 %s72, 1
      %p76 = scmp.eq.s32.totalorder %s17, 1
      %p77 = scmp.ne.s32.totalorder %s72, %s74
      %p78 = scmp.eq.s32.totalorder %s17, 0
      %p79 = por %p77, %p78
      %p80 = scmp.ne.s32.totalorder %s72, %s74
      %p81 = scmp.eq.s32.totalorder %s22, 1
      %p82 = por %p80, %p81
      %p83 = scmp.ne.s32.totalorder %s74, %s75
      %p84 = scmp.eq.s32.totalorder %s22, 0
      %p85 = por %p83, %p84
      %p86 = scmp.ne.s32.totalorder %s74, %s75
      %p87 = scmp.eq.s32.totalorder %s23, 1
      %p88 = por %p86, %p87
      %p90 = scmp.ne.s32.totalorder %s75, %s89
      %p91 = scmp.eq.s32.totalorder %s23, 0
      %p92 = por %p90, %p91
      %s94 = sadd.s32 %s93, 1
      %p97 = scmp.eq.s32.totalorder %s17, 1
      %p98 = scmp.ne.s32.totalorder %s93, %s95
      %p99 = scmp.eq.s32.totalorder %s17, 0
      %p100 = por %p98, %p99
      %p101 = scmp.ne.s32.totalorder %s93, %s95
      %p102 = scmp.eq.s32.totalorder %s22, 1
      %p103 = por %p101, %p102
      %p104 = scmp.ne.s32.totalorder %s95, %s96
      %p105 = scmp.eq.s32.totalorder %s22, 0
      %p106 = por %p104, %p105
      %p107 = scmp.ne.s32.totalorder %s95, %s96
      %p108 = scmp.eq.s32.totalorder %s23, 1
      %p109 = por %p107, %p108
      %p111 = scmp.ne.s32.totalorder %s96, %s110
      %p112 = scmp.eq.s32.totalorder %s23, 0
      %p113 = por %p111, %p112
      %s115 = sadd.s32 %s114, 1
      %p118 = scmp.eq.s32.totalorder %s17, 1
      %p119 = scmp.ne.s32.totalorder %s114, %s116
      %p120 = scmp.eq.s32.totalorder %s17, 0
      %p121 = por %p119, %p120
      %p122 = scmp.ne.s32.totalorder %s114, %s116
      %p123 = scmp.eq.s32.totalorder %s22, 1
      %p124 = por %p122, %p123
      %p125 = scmp.ne.s32.totalorder %s116, %s117
      %p126 = scmp.eq.s32.totalorder %s22, 0
      %p127 = por %p125, %p126
      %p128 = scmp.ne.s32.totalorder %s116, %s117
      %p129 = scmp.eq.s32.totalorder %s23, 1
      %p130 = por %p128, %p129
      %p132 = scmp.ne.s32.totalorder %s117, %s131
      %p133 = scmp.eq.s32.totalorder %s23, 0
      %p134 = por %p132, %p133
      %s136 = sadd.s32 %s135, 1
      %p139 = scmp.eq.s32.totalorder %s17, 1
      %p140 = scmp.ne.s32.totalorder %s135, %s137
      %p141 = scmp.eq.s32.totalorder %s17, 0
      %p142 = por %p140, %p141
      %p143 = scmp.ne.s32.totalorder %s135, %s137
      %p144 = scmp.eq.s32.totalorder %s22, 1
      %p145 = por %p143, %p144
      %p146 = scmp.ne.s32.totalorder %s137, %s138
      %p147 = scmp.eq.s32.totalorder %s22, 0
      %p148 = por %p146, %p147
      %p149 = scmp.ne.s32.totalorder %s137, %s138
      %p150 = scmp.eq.s32.totalorder %s23, 1
      %p151 = por %p149, %p150
      %p153 = scmp.ne.s32.totalorder %s138, %s152
      %p154 = scmp.eq.s32.totalorder %s23, 0
      %p155 = por %p153, %p154
      %s157 = sadd.s32 %s156, 1
      %p160 = scmp.eq.s32.totalorder %s17, 1
      %p161 = scmp.ne.s32.totalorder %s156, %s158
      %p162 = scmp.eq.s32.totalorder %s17, 0
      %p163 = por %p161, %p162
      %p164 = scmp.ne.s32.totalorder %s156, %s158
      %p165 = scmp.eq.s32.totalorder %s22, 1
      %p166 = por %p164, %p165
      %p167 = scmp.ne.s32.totalorder %s158, %s159
      %p168 = scmp.eq.s32.totalorder %s22, 0
      %p169 = por %p167, %p168
      %p170 = scmp.ne.s32.totalorder %s158, %s159
      %p171 = scmp.eq.s32.totalorder %s23, 1
      %p172 = por %p170, %p171
      %p174 = scmp.ne.s32.totalorder %s159, %s173
      %p175 = scmp.eq.s32.totalorder %s23, 0
      %p176 = por %p174, %p175
      %s177 = ssub.s32 %s17, %s24
      %p178 = scmp.eq.s32.totalorder %s177, 0
      %s180 = sadd.s32 %s179, 1
      %s181 = scalar_select %p178, %s179, %s180
      %p184 = pneg %p178
      %p185 = scmp.eq.s32.totalorder %s17, 1
      %p186 = por %p184, %p185
      %p187 = scmp.ne.s32.totalorder %s179, %s182
      %p188 = scmp.eq.s32.totalorder %s17, 0
      %p189 = por %p187, %p188
      %p190 = scmp.ne.s32.totalorder %s179, %s182
      %p191 = scmp.eq.s32.totalorder %s22, 1
      %p192 = por %p190, %p191
      %p193 = scmp.ne.s32.totalorder %s182, %s183
      %p194 = scmp.eq.s32.totalorder %s22, 0
      %p195 = por %p193, %p194
      %p196 = scmp.ne.s32.totalorder %s182, %s183
      %p197 = scmp.eq.s32.totalorder %s23, 1
      %p198 = por %p196, %p197
      %p200 = scmp.ne.s32.totalorder %s183, %s199
      %p201 = scmp.eq.s32.totalorder %s23, 0
      %p202 = por %p200, %p201
      %p203 = scmp.le.s32.totalorder 1, %s17
      %p204 = scmp.lt.s32.totalorder %s17, 3
      %p205 = pnand %p203, %p204
      %p206 = pneg %p205
      // Predicated region
      $region9: #{tpu_custom_call.1} parent=5 // pred_check
        _
      $region10: #{tpu_custom_call.1} parent=5 // pred_check_branch
        %208 = sbr.rel (%p205) target = $region12
      $region11: #{tpu_custom_call.1} parent=5 // pred_region
        %s209 = ssub.s32 %s17, 1
        // Predicated region
        $region13: #{tpu_custom_call.1} parent=11 // pred_check
          %p210 = pneg %p64
        $region14: #{tpu_custom_call.1} parent=11 // pred_check_branch
          %212 = sbr.rel (%p210) target = $region16
        $region15: #{tpu_custom_call.1} parent=11 // pred_region
          %214 = vsyncadd [#allocation5], 0
          %s215 = sshll.u32 %s1, 4
          %s216 = int_to_ptr.hbm [resolvable:$true] %s215
          %s217 = sshll.u32 [#allocation4], 4
          %s218 = int_to_ptr.vmem [resolvable:$true] %s217
          %223 = dma.hbm_to_vmem [thread:$0]  %s216, 320, %s218, [#allocation5], 64, 64, 4
        $region16: #{tpu_custom_call.1} parent=11 // pred_fallthru
          _
        // Predicated region
        $region17: #{tpu_custom_call.1} parent=11 // pred_check
          %p224 = pneg %p85
        $region18: #{tpu_custom_call.1} parent=11 // pred_check_branch
          %226 = sbr.rel (%p224) target = $region20
        $region19: #{tpu_custom_call.1} parent=11 // pred_region
          _
        $region20: #{tpu_custom_call.1} parent=11 // pred_fallthru
          _
        // Predicated region
        $region21: #{tpu_custom_call.1} parent=11 // pred_check
          %p227 = pneg %p106
        $region22: #{tpu_custom_call.1} parent=11 // pred_check_branch
          %229 = sbr.rel (%p227) target = $region24
        $region23: #{tpu_custom_call.1} parent=11 // pred_region
          _
        $region24: #{tpu_custom_call.1} parent=11 // pred_fallthru
          _
        // Predicated region
        $region25: #{tpu_custom_call.1} parent=11 // pred_check
          %p230 = pneg %p127
        $region26: #{tpu_custom_call.1} parent=11 // pred_check_branch
          %232 = sbr.rel (%p230) target = $region28
        $region27: #{tpu_custom_call.1} parent=11 // pred_region
          _
        $region28: #{tpu_custom_call.1} parent=11 // pred_fallthru
          _
        // Predicated region
        $region29: #{tpu_custom_call.1} parent=11 // pred_check
          %p233 = pneg %p148
        $region30: #{tpu_custom_call.1} parent=11 // pred_check_branch
          %235 = sbr.rel (%p233) target = $region32
        $region31: #{tpu_custom_call.1} parent=11 // pred_region
          _
        $region32: #{tpu_custom_call.1} parent=11 // pred_fallthru
          _
        // Predicated region
        $region33: #{tpu_custom_call.1} parent=11 // pred_check
          %p236 = pneg %p169
        $region34: #{tpu_custom_call.1} parent=11 // pred_check_branch
          %238 = sbr.rel (%p236) target = $region36
        $region35: #{tpu_custom_call.1} parent=11 // pred_region
          _
        $region36: #{tpu_custom_call.1} parent=11 // pred_fallthru
          _
      $region12: #{tpu_custom_call.1} parent=5 // pred_fallthru
        _
      %p239 = scmp.lt.s32.totalorder %s17, 2
      // Predicated region
      $region37: #{tpu_custom_call.1} parent=5 // pred_check
        %p240 = pneg %p239
      $region38: #{tpu_custom_call.1} parent=5 // pred_check_branch
        %242 = sbr.rel (%p240) target = $region40
      $region39: #{tpu_custom_call.1} parent=5 // pred_region
        // Predicated region
        $region41: #{tpu_custom_call.1} parent=39 // pred_check
          %p243 = pneg %p37
        $region42: #{tpu_custom_call.1} parent=39 // pred_check_branch
          %245 = sbr.rel (%p243) target = $region44
        $region43: #{tpu_custom_call.1} parent=39 // pred_region
          %s246 = sand.u32 %s27, 1
          %s247 = scalar_lea.sflag [#allocation3], %s246
          %s248 = sand.u32 %s27, 1
          %s249 = smul.addr %s248, 16
          %s250 = scalar_lea.vmem [#allocation2], %s249
          %s251 = smul.u32 2, %s17
          %s252 = ssub.s32 3, %s251
          %p253 = scmp.lt.s32.totalorder %s252, 2
          %s254 = scalar_select %p253, %s252, 2
          %s255 = smul.u32 8, %s254
          %s256 = ssub.s32 16, %s255
          %s257 = sshll.u32 %s256, 4
          %258 = vsyncadd %s247, %s257
          %p259 = scmp.ne.s32.totalorder 0, %s255
          %s260 = smul.addr %s251, 8
          %s261 = scalar_lea.hbm %s0, %s260
          %s262 = smul.u32 8, %s254
          %s263 = sshll.u32 %s261, 4
          %s264 = int_to_ptr.hbm [resolvable:$true] %s263
          %s265 = sshll.u32 %s250, 4
          %s266 = int_to_ptr.vmem [resolvable:$true] %s265
          %s267 = sshll.u32 %s262, 4
          %271 = dma.hbm_to_vmem [thread:$0]  (%p259), %s264, %s267, %s266, %s247, 128, 128, 8
        $region44: #{tpu_custom_call.1} parent=39 // pred_fallthru
          _
      $region40: #{tpu_custom_call.1} parent=5 // pred_fallthru
        _
      %p272 = scmp.le.s32.totalorder 1, %s17
      %p273 = scmp.lt.s32.totalorder %s17, 3
      %p274 = pnand %p272, %p273
      %p275 = pneg %p274
      // Predicated region
      $region45: #{tpu_custom_call.1} parent=5 // pred_check
        _
      $region46: #{tpu_custom_call.1} parent=5 // pred_check_branch
        %277 = sbr.rel (%p274) target = $region48
      $region47: #{tpu_custom_call.1} parent=5 // pred_region
        %s278 = ssub.s32 %s17, 1
        %s279 = sand.u32 %s30, 1
        %s280 = scalar_lea.sflag [#allocation3], %s279
        %s281 = sand.u32 %s30, 1
        %s282 = smul.addr %s281, 16
        %s283 = scalar_lea.vmem [#allocation2], %s282
        // Predicated region
        $region49: #{tpu_custom_call.1} parent=47 // pred_check
          %p284 = pneg %p43
        $region50: #{tpu_custom_call.1} parent=47 // pred_check_branch
          %286 = sbr.rel (%p284) target = $region52
        $region51: #{tpu_custom_call.1} parent=47 // pred_region
          %288 = dma.done %s280, 256
        $region52: #{tpu_custom_call.1} parent=47 // pred_fallthru
          _
        // Predicated region
        $region53: #{tpu_custom_call.1} parent=47 // pred_check
          %p289 = pneg %p64
        $region54: #{tpu_custom_call.1} parent=47 // pred_check_branch
          %291 = sbr.rel (%p289) target = $region56
        $region55: #{tpu_custom_call.1} parent=47 // pred_region
          %293 = dma.done [#allocation5], 320
        $region56: #{tpu_custom_call.1} parent=47 // pred_fallthru
          _
        %s294 = sand.u32 %s30, 1
        %s295 = scalar_lea.sflag [#allocation3], %s294
        %s296 = sand.u32 %s30, 1
        %s297 = smul.addr %s296, 16
        %s298 = scalar_lea.vmem [#allocation2], %s297
        %p299 = pneg %p43
        %p300 = pneg %p40
        %p301 = pneg %p64
        %p302 = pneg %p61
        %p303 = pneg %p85
        %p304 = pneg %p82
        %p305 = pneg %p106
        %p306 = pneg %p103
        %p307 = pneg %p127
        %p308 = pneg %p124
        %p309 = pneg %p148
        %p310 = pneg %p145
        %p311 = pneg %p169
        %p312 = pneg %p166
        %p313 = pneg %p195
        %p314 = pneg %p192
        %s315 = sand.u32 %s182, 1
        %s316 = sand.u32 %s182, 1
        %s317 = smul.addr %s316, 16
        %s318 = scalar_lea.vmem [#allocation6], %s317
        %s319 = smul.u32 2, %s22
        %s320 = ssub.s32 3, %s319
        %p321 = scmp.lt.s32.totalorder %s320, 2
        %s322 = scalar_select %p321, %s320, 2
        %s323 = smul.u32 8, %s322
        %s324 = smul.u32 2, %s22
        %s325 = ssub.s32 3, %s324
        %p326 = scmp.lt.s32.totalorder %s325, 2
        %s327 = scalar_select %p326, %s325, 2
        %s328 = smul.u32 8, %s327
        %v330 = vld [vmem:[%s283] sm:$0xff]
        %v331 = vld [vmem:[%s283 + $0x8] sm:$0xff]
        %v332 = vpack.c.bf16 %v331, %v330
        %v333 = vld [vmem:[#allocation4] sm:$0xf]
        %v334 = vld [vmem:[#allocation4 + $0x4] sm:$0xf]
        %v335 = vld [vmem:[#allocation4 + $0x8] sm:$0xf]
        %v336 = vld [vmem:[#allocation4 + $0xc] sm:$0xf]
        %v337 = vld [vmem:[#allocation4 + $0x10] sm:$0x7]
        %v338 = vld [vmem:[%s2] sm:$0x1]
        %v340 = vperm.slane %v338, 0
        %v347 = vunpack.c.l.b16 %v333
        %v348 = vunpack.c.l.b16 %v334
        %v349 = vunpack.c.l.b16 %v335
        %v350 = vunpack.c.l.b16 %v336
        %v351 = vunpack.c.l.b16 %v337
        %v352 = vpack.c.b16 %v348, %v347
        %v353 = vpack.c.b16 %v350, %v349
        %v354 = vpack.c.b16 %v351, %v351
        %vm357 = vcmask 302080
        %v359 = vsel %vm357, %v332, 0
        %vm361 = vcmask 1041408
        %vm362 = vcmask 1042432
        %v363 = vsel %vm361, 4294967295, 65535
        %v364 = vsel %vm362, %v363, 0
        %v366 = vand.u32 %v354, %v364
        %368 = vmatpush.bf16.msra.mxu0 0
        %369 = vmatpush.bf16.msra.mxu0 0
        %370 = vmatpush.bf16.msra.mxu0 0
        %371 = vmatpush.bf16.msra.mxu0 0
        %372 = vmatpush.bf16.msra.mxu0 0
        %373 = vmatpush.bf16.msra.mxu0 %v366
        %374 = vmatpush.bf16.msra.mxu0 %v353
        %375 = vmatpush.bf16.msra.mxu0 %v352
        %376 = vmatmul.bf16.gmra.mxu0 %v359
        %v377 = vpop.f32.mrf.mxu0
        %v378 = vadd.f32 %v340, %v377
        %v379 = vpop.f32.mrf.mxu0
        %v380 = vadd.f32 %v340, %v379
        %381 = vdwg.mxu0
        %v382 = vmax.f32 %v378, 0.0
        %v383 = vmax.f32 %v380, 0.0
        %v384 = vpack.c.bf16 %v383, %v382
        %v385 = vld [vmem:[%s3] sm:$0xf]
        %v386 = vld [vmem:[%s3 + $0x4] sm:$0xf]
        %v387 = vld [vmem:[%s3 + $0x8] sm:$0xf]
        %v388 = vld [vmem:[%s3 + $0xc] sm:$0xf]
        %v389 = vld [vmem:[%s3 + $0x10] sm:$0xf]
        %v390 = vld [vmem:[%s3 + $0x14] sm:$0xf]
        %v391 = vld [vmem:[%s3 + $0x18] sm:$0xf]
        %v392 = vld [vmem:[%s3 + $0x1c] sm:$0xf]
        %v393 = vld [vmem:[%s3 + $0x20] sm:$0xf]
        %v394 = vld [vmem:[%s3 + $0x24] sm:$0xf]
        %v395 = vld [vmem:[%s3 + $0x28] sm:$0xf]
        %v396 = vld [vmem:[%s3 + $0x2c] sm:$0xf]
        %v397 = vld [vmem:[%s3 + $0x30] sm:$0xf]
        %v398 = vld [vmem:[%s3 + $0x34] sm:$0xf]
        %v399 = vld [vmem:[%s3 + $0x38] sm:$0xf]
        %v400 = vld [vmem:[%s3 + $0x3c] sm:$0xf]
        %v401 = vld [vmem:[%s4] sm:$0x1]
        %v403 = vperm.slane %v401, 0
        %v421 = vunpack.c.l.b16 %v385
        %v422 = vunpack.c.l.b16 %v386
        %v423 = vunpack.c.l.b16 %v387
        %v424 = vunpack.c.l.b16 %v388
        %v425 = vunpack.c.l.b16 %v389
        %v426 = vunpack.c.l.b16 %v390
        %v427 = vunpack.c.l.b16 %v391
        %v428 = vunpack.c.l.b16 %v392
        %v429 = vunpack.c.l.b16 %v393
        %v430 = vunpack.c.l.b16 %v394
        %v431 = vunpack.c.l.b16 %v395
        %v432 = vunpack.c.l.b16 %v396
        %v433 = vunpack.c.l.b16 %v397
        %v434 = vunpack.c.l.b16 %v398
        %v435 = vunpack.c.l.b16 %v399
        %v436 = vunpack.c.l.b16 %v400
        %v437 = vpack.c.b16 %v422, %v421
        %v438 = vpack.c.b16 %v424, %v423
        %v439 = vpack.c.b16 %v426, %v425
        %v440 = vpack.c.b16 %v428, %v427
        %v441 = vpack.c.b16 %v430, %v429
        %v442 = vpack.c.b16 %v432, %v431
        %v443 = vpack.c.b16 %v434, %v433
        %v444 = vpack.c.b16 %v436, %v435
        %453 = vmatpush.bf16.msra.mxu0 %v444
        %454 = vmatpush.bf16.msra.mxu0 %v443
        %455 = vmatpush.bf16.msra.mxu0 %v442
        %456 = vmatpush.bf16.msra.mxu0 %v441
        %457 = vmatpush.bf16.msra.mxu0 %v440
        %458 = vmatpush.bf16.msra.mxu0 %v439
        %459 = vmatpush.bf16.msra.mxu0 %v438
        %460 = vmatpush.bf16.msra.mxu0 %v437
        %461 = vmatmul.bf16.gmra.mxu0 %v384
        %v462 = vpop.f32.mrf.mxu0
        %v463 = vadd.f32 %v403, %v462
        %v464 = vpop.f32.mrf.mxu0
        %v465 = vadd.f32 %v403, %v464
        %466 = vdwg.mxu0
        %v467 = vmax.f32 %v463, 0.0
        %v468 = vmax.f32 %v465, 0.0
        %v469 = vpack.c.bf16 %v468, %v467
        %v470 = vld [vmem:[%s5] sm:$0xf]
        %v471 = vld [vmem:[%s5 + $0x4] sm:$0xf]
        %v472 = vld [vmem:[%s5 + $0x8] sm:$0xf]
        %v473 = vld [vmem:[%s5 + $0xc] sm:$0xf]
        %v474 = vld [vmem:[%s5 + $0x10] sm:$0xf]
        %v475 = vld [vmem:[%s5 + $0x14] sm:$0xf]
        %v476 = vld [vmem:[%s5 + $0x18] sm:$0xf]
        %v477 = vld [vmem:[%s5 + $0x1c] sm:$0xf]
        %v478 = vld [vmem:[%s5 + $0x20] sm:$0xf]
        %v479 = vld [vmem:[%s5 + $0x24] sm:$0xf]
        %v480 = vld [vmem:[%s5 + $0x28] sm:$0xf]
        %v481 = vld [vmem:[%s5 + $0x2c] sm:$0xf]
        %v482 = vld [vmem:[%s5 + $0x30] sm:$0xf]
        %v483 = vld [vmem:[%s5 + $0x34] sm:$0xf]
        %v484 = vld [vmem:[%s5 + $0x38] sm:$0xf]
        %v485 = vld [vmem:[%s5 + $0x3c] sm:$0xf]
        %v486 = vld [vmem:[%s6] sm:$0x1]
        %v488 = vperm.slane %v486, 0
        %v506 = vunpack.c.l.b16 %v470
        %v507 = vunpack.c.l.b16 %v471
        %v508 = vunpack.c.l.b16 %v472
        %v509 = vunpack.c.l.b16 %v473
        %v510 = vunpack.c.l.b16 %v474
        %v511 = vunpack.c.l.b16 %v475
        %v512 = vunpack.c.l.b16 %v476
        %v513 = vunpack.c.l.b16 %v477
        %v514 = vunpack.c.l.b16 %v478
        %v515 = vunpack.c.l.b16 %v479
        %v516 = vunpack.c.l.b16 %v480
        %v517 = vunpack.c.l.b16 %v481
        %v518 = vunpack.c.l.b16 %v482
        %v519 = vunpack.c.l.b16 %v483
        %v520 = vunpack.c.l.b16 %v484
        %v521 = vunpack.c.l.b16 %v485
        %v522 = vpack.c.b16 %v507, %v506
        %v523 = vpack.c.b16 %v509, %v508
        %v524 = vpack.c.b16 %v511, %v510
        %v525 = vpack.c.b16 %v513, %v512
        %v526 = vpack.c.b16 %v515, %v514
        %v527 = vpack.c.b16 %v517, %v516
        %v528 = vpack.c.b16 %v519, %v518
        %v529 = vpack.c.b16 %v521, %v520
        %538 = vmatpush.bf16.msra.mxu0 %v529
        %539 = vmatpush.bf16.msra.mxu0 %v528
        %540 = vmatpush.bf16.msra.mxu0 %v527
        %541 = vmatpush.bf16.msra.mxu0 %v526
        %542 = vmatpush.bf16.msra.mxu0 %v525
        %543 = vmatpush.bf16.msra.mxu0 %v524
        %544 = vmatpush.bf16.msra.mxu0 %v523
        %545 = vmatpush.bf16.msra.mxu0 %v522
        %546 = vmatmul.bf16.gmra.mxu0 %v469
        %v547 = vpop.f32.mrf.mxu0
        %v548 = vadd.f32 %v488, %v547
        %v549 = vpop.f32.mrf.mxu0
        %v550 = vadd.f32 %v488, %v549
        %551 = vdwg.mxu0
        %vm552 = vcmask 80896
        %553 = vst.msk [vmem:[%s318] sm:$0xff] %vm552, %v548
        %554 = vst.msk [vmem:[%s318 + $0x8] sm:$0xff] %vm552, %v550
        %s555 = sand.u32 %s182, 1
        %s556 = sand.u32 %s182, 1
        %s557 = smul.addr %s556, 16
        %s558 = scalar_lea.vmem [#allocation6], %s557
        // Predicated region
        $region57: #{tpu_custom_call.1} parent=47 // pred_check
          %p559 = pneg %p192
        $region58: #{tpu_custom_call.1} parent=47 // pred_check_branch
          %561 = sbr.rel (%p559) target = $region60
        $region59: #{tpu_custom_call.1} parent=47 // pred_region
          %s562 = smul.u32 2, %s22
          %s563 = ssub.s32 3, %s562
          %p564 = scmp.lt.s32.totalorder %s563, 2
          %s565 = scalar_select %p564, %s563, 2
          %s566 = smul.u32 8, %s565
          %p567 = scmp.ne.s32.totalorder 0, %s566
          %s568 = smul.addr %s562, 8
          %s569 = scalar_lea.vmem %s7, %s568
          // Predicated region
          $region61: #{tpu_custom_call.1} parent=59 // pred_check
            %p570 = pneg %p567
          $region62: #{tpu_custom_call.1} parent=59 // pred_check_branch
            %572 = sbr.rel (%p570) target = $region64
          $region63: #{tpu_custom_call.1} parent=59 // pred_region
            // Predicated region
            $region65: #{tpu_custom_call.1} parent=63 // pred_check
              _
            $region66: #{tpu_custom_call.1} parent=63 // pred_check_branch
              %574 = sbr.rel (0) target = $region68
            $region67: #{tpu_custom_call.1} parent=63 // pred_region
              // Predicated region
              $region87: #{tpu_custom_call.1} parent=67 // pred_check
                _
              $region88: #{tpu_custom_call.1} parent=67 // pred_check_branch
                %626 = sbr.rel (0) target = $region90
              $region89: #{tpu_custom_call.1} parent=67 // pred_region
                %s627 = sshrl.u32 %s565, 1
                // While loop
                $region91: #{tpu_custom_call.1} parent=89 // loop_pre_header
                  _
                $region92: #{tpu_custom_call.1} parent=89 // loop_header
                  %s629 = sphi 0, %s631
                  %p630 = scmp.ge.s32.totalorder %s629, %s627
                  %s634 = sphi 0, %s643
                  %s635 = sphi %s558, %s646
                  %s636 = sphi %s569, %s647
                $region93: #{tpu_custom_call.1} parent=89 // loop_header_branch
                  %633 = sbr.rel (%p630) target = $region97
                $region94: #{tpu_custom_call.1} parent=89 // loop_body
                  %v637 = vld [vmem:[%s635] sm:$0xff]
                  %638 = vst [vmem:[%s636] sm:$0xff] %v637
                  %v639 = vld [vmem:[%s635 + $0x8] sm:$0xff]
                  %640 = vst [vmem:[%s636 + $0x8] sm:$0xff] %v639
                  %s641 = sadd.s32 1, %s634
                  %p642 = scmp.ge.s32.totalorder %s641, %s627
                  %s643 = scalar_select %p642, 0, %s641
                  %s644 = smul.u32 %s643, 16
                  %s645 = smul.u32 %s643, 16
                  %s646 = scalar_lea.vmem %s558, %s644 [#allocation6]
                  %s647 = scalar_lea.vmem %s569, %s645
                $region95: #{tpu_custom_call.1} parent=89 // loop_footer
                  %s631 = sadd.s32 %s629, 1
                $region96: #{tpu_custom_call.1} parent=89 // loop_footer_branch
                  %628 = sbr.rel target = $region92
                $region97: #{tpu_custom_call.1} parent=89 // loop_exit
                  _
                %s648 = sshrl.u32 %s565, 1
                %s649 = sand.u32 %s565, 1
                %s650 = smul.u32 %s648, 2
                %s651 = smul.u32 8, %s650
                %s652 = scalar_lea.vmem %s558, %s651 [#allocation6]
                %s653 = smul.u32 8, %s650
                %s654 = scalar_lea.vmem %s569, %s653
                // While loop
                $region98: #{tpu_custom_call.1} parent=89 // loop_pre_header
                  _
                $region99: #{tpu_custom_call.1} parent=89 // loop_header
                  %s656 = sphi 0, %s658
                  %p657 = scmp.ge.s32.totalorder %s656, %s649
                  %s661 = sphi 0, %s668
                  %s662 = sphi %s652, %s671
                  %s663 = sphi %s654, %s672
                $region100: #{tpu_custom_call.1} parent=89 // loop_header_branch
                  %660 = sbr.rel (%p657) target = $region104
                $region101: #{tpu_custom_call.1} parent=89 // loop_body
                  %v664 = vld [vmem:[%s662] sm:$0xff]
                  %665 = vst [vmem:[%s663] sm:$0xff] %v664
                  %s666 = sadd.s32 1, %s661
                  %p667 = scmp.ge.s32.totalorder %s666, %s649
                  %s668 = scalar_select %p667, 0, %s666
                  %s669 = smul.u32 %s668, 8
                  %s670 = smul.u32 %s668, 8
                  %s671 = scalar_lea.vmem %s652, %s669 [#allocation6]
                  %s672 = scalar_lea.vmem %s654, %s670
                $region102: #{tpu_custom_call.1} parent=89 // loop_footer
                  %s658 = sadd.s32 %s656, 1
                $region103: #{tpu_custom_call.1} parent=89 // loop_footer_branch
                  %655 = sbr.rel target = $region99
                $region104: #{tpu_custom_call.1} parent=89 // loop_exit
                  _
              $region90: #{tpu_custom_call.1} parent=67 // pred_fallthru
                _
              // Predicated region
              $region105: #{tpu_custom_call.1} parent=67 // pred_check
                _
              $region106: #{tpu_custom_call.1} parent=67 // pred_check_branch
                %674 = sbr.rel target = $region108
              $region107: #{tpu_custom_call.1} parent=67 // pred_region
                _
              $region108: #{tpu_custom_call.1} parent=67 // pred_fallthru
                _
            $region68: #{tpu_custom_call.1} parent=63 // pred_fallthru
              _
            // Predicated region
            $region69: #{tpu_custom_call.1} parent=63 // pred_check
              _
            $region70: #{tpu_custom_call.1} parent=63 // pred_check_branch
              %576 = sbr.rel target = $region72
            $region71: #{tpu_custom_call.1} parent=63 // pred_region
              %s578 = ssub.s32 256, 1
              %s579 = sshrl.u32 %s565, 1
              // While loop
              $region73: #{tpu_custom_call.1} parent=71 // loop_pre_header
                _
              $region74: #{tpu_custom_call.1} parent=71 // loop_header
                %s581 = sphi 0, %s583
                %p582 = scmp.ge.s32.totalorder %s581, %s579
                %s586 = sphi 0, %s595
                %s587 = sphi %s558, %s598
                %s588 = sphi %s569, %s599
              $region75: #{tpu_custom_call.1} parent=71 // loop_header_branch
                %585 = sbr.rel (%p582) target = $region79
              $region76: #{tpu_custom_call.1} parent=71 // loop_body
                %v589 = vld [vmem:[%s587] sm:%s578]
                %590 = vst [vmem:[%s588] sm:%s578] %v589
                %v591 = vld [vmem:[%s587 + $0x8] sm:%s578]
                %592 = vst [vmem:[%s588 + $0x8] sm:%s578] %v591
                %s593 = sadd.s32 1, %s586
                %p594 = scmp.ge.s32.totalorder %s593, %s579
                %s595 = scalar_select %p594, 0, %s593
                %s596 = smul.u32 %s595, 16
                %s597 = smul.u32 %s595, 16
                %s598 = scalar_lea.vmem %s558, %s596 [#allocation6]
                %s599 = scalar_lea.vmem %s569, %s597
              $region77: #{tpu_custom_call.1} parent=71 // loop_footer
                %s583 = sadd.s32 %s581, 1
              $region78: #{tpu_custom_call.1} parent=71 // loop_footer_branch
                %580 = sbr.rel target = $region74
              $region79: #{tpu_custom_call.1} parent=71 // loop_exit
                _
              %s600 = sshrl.u32 %s565, 1
              %s601 = sand.u32 %s565, 1
              %s602 = smul.u32 %s600, 2
              %s603 = smul.u32 8, %s602
              %s604 = scalar_lea.vmem %s558, %s603 [#allocation6]
              %s605 = smul.u32 8, %s602
              %s606 = scalar_lea.vmem %s569, %s605
              // While loop
              $region80: #{tpu_custom_call.1} parent=71 // loop_pre_header
                _
              $region81: #{tpu_custom_call.1} parent=71 // loop_header
                %s608 = sphi 0, %s610
                %p609 = scmp.ge.s32.totalorder %s608, %s601
                %s613 = sphi 0, %s620
                %s614 = sphi %s604, %s623
                %s615 = sphi %s606, %s624
              $region82: #{tpu_custom_call.1} parent=71 // loop_header_branch
                %612 = sbr.rel (%p609) target = $region86
              $region83: #{tpu_custom_call.1} parent=71 // loop_body
                %v616 = vld [vmem:[%s614] sm:%s578]
                %617 = vst [vmem:[%s615] sm:%s578] %v616
                %s618 = sadd.s32 1, %s613
                %p619 = scmp.ge.s32.totalorder %s618, %s601
                %s620 = scalar_select %p619, 0, %s618
                %s621 = smul.u32 %s620, 8
                %s622 = smul.u32 %s620, 8
                %s623 = scalar_lea.vmem %s604, %s621 [#allocation6]
                %s624 = scalar_lea.vmem %s606, %s622
              $region84: #{tpu_custom_call.1} parent=71 // loop_footer
                %s610 = sadd.s32 %s608, 1
              $region85: #{tpu_custom_call.1} parent=71 // loop_footer_branch
                %607 = sbr.rel target = $region81
              $region86: #{tpu_custom_call.1} parent=71 // loop_exit
                _
            $region72: #{tpu_custom_call.1} parent=63 // pred_fallthru
              _
          $region64: #{tpu_custom_call.1} parent=59 // pred_fallthru
            _
          %675 = vnop
        $region60: #{tpu_custom_call.1} parent=47 // pred_fallthru
          _
      $region48: #{tpu_custom_call.1} parent=5 // pred_fallthru
        _
      %p676 = scmp.le.s32.totalorder 2, %s17
      // Predicated region
      $region109: #{tpu_custom_call.1} parent=5 // pred_check
        %p677 = pneg %p676
      $region110: #{tpu_custom_call.1} parent=5 // pred_check_branch
        %679 = sbr.rel (%p677) target = $region112
      $region111: #{tpu_custom_call.1} parent=5 // pred_region
        %s680 = ssub.s32 %s17, 2
        // Predicated region
        $region113: #{tpu_custom_call.1} parent=111 // pred_check
          %p681 = pneg %p198
        $region114: #{tpu_custom_call.1} parent=111 // pred_check_branch
          %683 = sbr.rel (%p681) target = $region116
        $region115: #{tpu_custom_call.1} parent=111 // pred_region
          %s684 = sand.u32 %s183, 1
          %s685 = sand.u32 %s183, 1
          %s686 = smul.addr %s685, 16
          %s687 = scalar_lea.vmem [#allocation6], %s686
        $region116: #{tpu_custom_call.1} parent=111 // pred_fallthru
          _
      $region112: #{tpu_custom_call.1} parent=5 // pred_fallthru
        _
    $region6: #{tpu_custom_call.1} parent=1 // loop_footer
      %s21 = sadd.s32 1, %s17
    $region7: #{tpu_custom_call.1} parent=1 // loop_footer_branch
      %16 = sbr.rel target = $region3
    $region8: #{tpu_custom_call.1} parent=1 // loop_exit
      _
    %688 = vsyncpa [#allocation3], 1
    %s689 = scalar_lea.sflag [#allocation3], 1
    %690 = vsyncpa %s689, 1
    %691 = vsyncpa [#allocation5], 1

</llo_original>
